<compile_context>
chip_gen: v7x
topology: tpu7x:2x2x1
jax: 0.10.0
libtpu: 0.0.40
codegen_flags: <defaults>
</compile_context>

<pallas_src>
import functools

import jax
import jax.numpy as jnp
from jax import lax
from jax.experimental import pallas as pl
from jax.experimental.pallas import tpu as pltpu


# ----------------------------------------------------------------------------
# Fused kernel: per-batch multi-head causal attention + output projection.
#   grid = (B,); each step sees the full (T, C) slab of x plus the stacked
#   qkv weight (C, 3*H*hs), the projection weight (H*hs, C) and bias (1, C),
#   and writes one lane-dense (T, C) output tile.
# ----------------------------------------------------------------------------
def _mha_fused_kernel(x_ref, wqkv_ref, wproj_ref, bproj_ref, o_ref,
                      *, num_heads, head_size, seq_len):
    x = x_ref[0]                       # (T, C)
    w_qkv = wqkv_ref[...]              # (C, 3*H*hs), q-part pre-scaled by hs^-0.5
    w_proj = wproj_ref[...]            # (H*hs, C)
    b_proj = bproj_ref[...]            # (1, C)

    hs = head_size
    Hhs = num_heads * head_size

    # One wide matmul for q/k/v of all heads.
    qkv = jnp.dot(x, w_qkv, preferred_element_type=jnp.float32)   # (T, 3*H*hs)
    q_all = qkv[:, 0 * Hhs:1 * Hhs]
    k_all = qkv[:, 1 * Hhs:2 * Hhs]
    v_all = qkv[:, 2 * Hhs:3 * Hhs]

    # Causal mask bias, computed once per grid step (not per head).
    row = lax.broadcasted_iota(jnp.int32, (seq_len, seq_len), 0)
    col = lax.broadcasted_iota(jnp.int32, (seq_len, seq_len), 1)
    causal = col <= row
    neg_big = jnp.float32(-1e30)       # finite: no exp(-inf - -inf) NaN hazard

    head_outs = []
    for h in range(num_heads):         # static Python loop, H is small
        q = q_all[:, h * hs:(h + 1) * hs]      # (T, hs), already scaled
        k = k_all[:, h * hs:(h + 1) * hs]      # (T, hs)
        v = v_all[:, h * hs:(h + 1) * hs]      # (T, hs)

        # scores = q @ k^T via transposed-RHS contraction (no k.T materialization)
        scores = lax.dot_general(
            q, k,
            dimension_numbers=(((1,), (1,)), ((), ())),
            preferred_element_type=jnp.float32)                   # (T, T)
        scores = jnp.where(causal, scores, neg_big)

        # numerically-stable softmax, denominator reciprocal on the EUP
        m = jnp.max(scores, axis=-1, keepdims=True)
        p = jnp.exp(scores - m)
        p = p * pl.reciprocal(jnp.sum(p, axis=-1, keepdims=True), approx=True)

        head_outs.append(jnp.dot(p, v, preferred_element_type=jnp.float32))

    concat = jnp.concatenate(head_outs, axis=-1)                  # (T, H*hs)

    # Output projection fused in: one matmul + bias, lane-dense (T, C) store.
    y = jnp.dot(concat, w_proj, preferred_element_type=jnp.float32) + b_proj
    o_ref[0] = y.astype(o_ref.dtype)


def multi_head_attention(x, wq, wk, wv, w_proj, b_proj):
    """x: (B, T, C); wq/wk/wv: (H, C, hs); w_proj: (H*hs, C); b_proj: (C,)."""
    B, T, C = x.shape
    H, _, hs = wq.shape
    Hhs = H * hs

    # Stack head weights into a single (C, 3*H*hs) matrix so all q/k/v come from
    # one matmul.  Fold the 1/sqrt(hs) attention scale into the query weights at
    # trace time (outside the kernel's hot path).
    scale = jnp.float32(hs) ** -0.5
    wq_s = jnp.transpose(wq * scale, (1, 0, 2)).reshape(C, Hhs)   # (C, H*hs)
    wk_s = jnp.transpose(wk, (1, 0, 2)).reshape(C, Hhs)
    wv_s = jnp.transpose(wv, (1, 0, 2)).reshape(C, Hhs)
    w_qkv = jnp.concatenate([wq_s, wk_s, wv_s], axis=-1)          # (C, 3*H*hs)

    y = pl.pallas_call(
        functools.partial(_mha_fused_kernel,
                          num_heads=H, head_size=hs, seq_len=T),
        out_shape=jax.ShapeDtypeStruct((B, T, C), jnp.float32),
        grid_spec=pltpu.PrefetchScalarGridSpec(
            num_scalar_prefetch=0,
            grid=(B,),
            in_specs=[
                pl.BlockSpec((1, T, C), lambda b: (b, 0, 0)),       # x slab
                pl.BlockSpec((C, 3 * Hhs), lambda b: (0, 0)),       # stacked qkv W
                pl.BlockSpec((Hhs, C), lambda b: (0, 0)),           # proj W
                pl.BlockSpec((1, C), lambda b: (0, 0)),             # proj bias
            ],
            out_specs=pl.BlockSpec((1, T, C), lambda b: (b, 0, 0)),  # lane-dense
        ),
        compiler_params=pltpu.CompilerParams(
            dimension_semantics=("parallel",)),                     # v7x: 2 TCs
    )(x, w_qkv, w_proj, b_proj.reshape(1, C))

    return y


# ----------------------------------------------------------------------------
# Pure-JAX reference (mirrors the PyTorch forward, eval mode)
# ----------------------------------------------------------------------------
def reference(x, wq, wk, wv, w_proj, b_proj):
    B, T, C = x.shape
    H, _, hs = wq.shape
    outs = []
    for h in range(H):
        q = x @ wq[h]
        k = x @ wk[h]
        v = x @ wv[h]
        w = (q @ jnp.swapaxes(k, -2, -1)) * (hs ** -0.5)
        mask = jnp.tril(jnp.ones((T, T), bool))
        w = jnp.where(mask, w, -jnp.inf)
        w = jax.nn.softmax(w, axis=-1)
        outs.append(w @ v)
    concat = jnp.concatenate(outs, axis=-1)
    return concat @ w_proj + b_proj


if __name__ == "__main__":
    # module hyper-parameters implied by __init__
    embeddings_size = 32
    num_heads = 4
    head_size = 8
    block_size = 8        # seq length T (<= block_size so tril[:T,:T] is full)
    B, T, C = 2, block_size, embeddings_size

    key = jax.random.PRNGKey(0)
    ks = jax.random.split(key, 6)

    # deterministic parameter init (uniform +-1/sqrt(fan_in), like nn.Linear)
    bnd_in = 1.0 / (C ** 0.5)
    bnd_proj = 1.0 / ((num_heads * head_size) ** 0.5)
    wq = jax.random.uniform(ks[0], (num_heads, C, head_size), jnp.float32, -bnd_in, bnd_in)
    wk = jax.random.uniform(ks[1], (num_heads, C, head_size), jnp.float32, -bnd_in, bnd_in)
    wv = jax.random.uniform(ks[2], (num_heads, C, head_size), jnp.float32, -bnd_in, bnd_in)
    w_proj = jax.random.uniform(ks[3], (num_heads * head_size, C), jnp.float32, -bnd_proj, bnd_proj)
    b_proj = jax.random.uniform(ks[4], (C,), jnp.float32, -bnd_proj, bnd_proj)

    x = jax.random.normal(ks[5], (B, T, C), jnp.float32)

    y = multi_head_attention(x, wq, wk, wv, w_proj, b_proj)
    y = jax.block_until_ready(y)

    y_ref = reference(x, wq, wk, wv, w_proj, b_proj)
    assert y.shape == (B, T, C)
    # tolerance accounts for the EUP approx reciprocal in the softmax denominator
    assert jnp.allclose(y, y_ref, atol=2e-3, rtol=2e-3), \
        f"mismatch: max abs err {jnp.max(jnp.abs(y - y_ref))}"

    print("KERNEL_OK")
</pallas_src>

<mosaic_0001>
module attributes {stable_mosaic.version = 11 : i64} {
  func.func @_mha_fused_kernel(%arg0: i32, %arg1: memref<1x8x32xf32, #tpu.memory_space<vmem>>, %arg2: memref<32x96xf32, #tpu.memory_space<vmem>>, %arg3: memref<32x32xf32, #tpu.memory_space<vmem>>, %arg4: memref<1x32xf32, #tpu.memory_space<vmem>>, %arg5: memref<1x8x32xf32, #tpu.memory_space<vmem>>) attributes {dimension_semantics = [#tpu.dimension_semantics<parallel>], iteration_bounds = array<i64: 2>, scalar_prefetch = 0 : i64, scratch_operands = 0 : i64, tpu.core_type = #tpu.core_type<tc>, window_params = [{transform_indices = @transform_0, window_bounds = array<i64: 1, 8, 32>}, {pipeline_mode = #tpu.pipeline_mode<synchronous>, transform_indices = @transform_1, window_bounds = array<i64: 32, 96>}, {pipeline_mode = #tpu.pipeline_mode<synchronous>, transform_indices = @transform_2, window_bounds = array<i64: 32, 32>}, {pipeline_mode = #tpu.pipeline_mode<synchronous>, transform_indices = @transform_3, window_bounds = array<i64: 1, 32>}, {transform_indices = @transform_4, window_bounds = array<i64: 1, 8, 32>}]} {
    %c0 = arith.constant 0 : index
    %c0_0 = arith.constant 0 : index
    %c0_1 = arith.constant 0 : index
    %0 = vector.load %arg1[%c0, %c0_0, %c0_1] : memref<1x8x32xf32, #tpu.memory_space<vmem>>, vector<1x8x32xf32>
    %1 = vector.shape_cast %0 : vector<1x8x32xf32> to vector<8x32xf32>
    %c0_2 = arith.constant 0 : index
    %c0_3 = arith.constant 0 : index
    %2 = vector.load %arg2[%c0_2, %c0_3] : memref<32x96xf32, #tpu.memory_space<vmem>>, vector<32x96xf32>
    %c0_4 = arith.constant 0 : index
    %c0_5 = arith.constant 0 : index
    %3 = vector.load %arg3[%c0_4, %c0_5] : memref<32x32xf32, #tpu.memory_space<vmem>>, vector<32x32xf32>
    %c0_6 = arith.constant 0 : index
    %c0_7 = arith.constant 0 : index
    %4 = vector.load %arg4[%c0_6, %c0_7] : memref<1x32xf32, #tpu.memory_space<vmem>>, vector<1x32xf32>
    %cst = arith.constant dense<0.000000e+00> : vector<8x96xf32>
    %5 = tpu.matmul %1, %2, %cst {dimension_numbers = #tpu.dot_dimension_numbers<[1], [0], [0], [1], [0, 0, 1, 1], [], []>} : vector<8x32xf32>, vector<32x96xf32>, vector<8x96xf32> -> vector<8x96xf32>
    %6 = vector.extract_strided_slice %5 {offsets = [0, 0], sizes = [8, 32], strides = [1, 1]} : vector<8x96xf32> to vector<8x32xf32>
    %7 = vector.extract_strided_slice %5 {offsets = [0, 32], sizes = [8, 32], strides = [1, 1]} : vector<8x96xf32> to vector<8x32xf32>
    %8 = vector.extract_strided_slice %5 {offsets = [0, 64], sizes = [8, 32], strides = [1, 1]} : vector<8x96xf32> to vector<8x32xf32>
    %9 = tpu.iota {dimensions = array<i32: 0>} : vector<8x8xi32>
    %10 = tpu.iota {dimensions = array<i32: 1>} : vector<8x8xi32>
    %11 = arith.cmpi sle, %10, %9 : vector<8x8xi32>
    %12 = vector.extract_strided_slice %6 {offsets = [0, 0], sizes = [8, 8], strides = [1, 1]} : vector<8x32xf32> to vector<8x8xf32>
    %13 = vector.extract_strided_slice %7 {offsets = [0, 0], sizes = [8, 8], strides = [1, 1]} : vector<8x32xf32> to vector<8x8xf32>
    %14 = vector.extract_strided_slice %8 {offsets = [0, 0], sizes = [8, 8], strides = [1, 1]} : vector<8x32xf32> to vector<8x8xf32>
    %cst_8 = arith.constant dense<0.000000e+00> : vector<8x8xf32>
    %15 = tpu.matmul %12, %13, %cst_8 {dimension_numbers = #tpu.dot_dimension_numbers<[1], [1], [0], [0], [0, 0, 1, 0], [], []>} : vector<8x8xf32>, vector<8x8xf32>, vector<8x8xf32> -> vector<8x8xf32>
    %cst_9 = arith.constant -1.000000e+30 : f32
    %16 = vector.broadcast %cst_9 : f32 to vector<8x8xf32>
    %17 = arith.select %11, %15, %16 : vector<8x8xi1>, vector<8x8xf32>
    %cst_10 = arith.constant dense<0xFF800000> : vector<8xf32>
    %18 = vector.multi_reduction <maximumf>, %17, %cst_10 [1] : vector<8x8xf32> to vector<8xf32>
    %19 = vector.shape_cast %18 : vector<8xf32> to vector<8x1xf32>
    %20 = vector.broadcast %19 : vector<8x1xf32> to vector<8x8xf32>
    %21 = arith.subf %17, %20 : vector<8x8xf32>
    %22 = math.exp %21 : vector<8x8xf32>
    %cst_11 = arith.constant dense<0.000000e+00> : vector<8xf32>
    %23 = vector.multi_reduction <add>, %22, %cst_11 [1] : vector<8x8xf32> to vector<8xf32>
    %24 = vector.shape_cast %23 : vector<8xf32> to vector<8x1xf32>
    %25 = tpu.reciprocal %24 {approx = true} : vector<8x1xf32> -> vector<8x1xf32>
    %26 = vector.broadcast %25 : vector<8x1xf32> to vector<8x8xf32>
    %27 = arith.mulf %22, %26 : vector<8x8xf32>
    %cst_12 = arith.constant dense<0.000000e+00> : vector<8x8xf32>
    %28 = tpu.matmul %27, %14, %cst_12 {dimension_numbers = #tpu.dot_dimension_numbers<[1], [0], [0], [1], [0, 0, 1, 1], [], []>} : vector<8x8xf32>, vector<8x8xf32>, vector<8x8xf32> -> vector<8x8xf32>
    %29 = vector.extract_strided_slice %6 {offsets = [0, 8], sizes = [8, 8], strides = [1, 1]} : vector<8x32xf32> to vector<8x8xf32>
    %30 = vector.extract_strided_slice %7 {offsets = [0, 8], sizes = [8, 8], strides = [1, 1]} : vector<8x32xf32> to vector<8x8xf32>
    %31 = vector.extract_strided_slice %8 {offsets = [0, 8], sizes = [8, 8], strides = [1, 1]} : vector<8x32xf32> to vector<8x8xf32>
    %cst_13 = arith.constant dense<0.000000e+00> : vector<8x8xf32>
    %32 = tpu.matmul %29, %30, %cst_13 {dimension_numbers = #tpu.dot_dimension_numbers<[1], [1], [0], [0], [0, 0, 1, 0], [], []>} : vector<8x8xf32>, vector<8x8xf32>, vector<8x8xf32> -> vector<8x8xf32>
    %cst_14 = arith.constant -1.000000e+30 : f32
    %33 = vector.broadcast %cst_14 : f32 to vector<8x8xf32>
    %34 = arith.select %11, %32, %33 : vector<8x8xi1>, vector<8x8xf32>
    %cst_15 = arith.constant dense<0xFF800000> : vector<8xf32>
    %35 = vector.multi_reduction <maximumf>, %34, %cst_15 [1] : vector<8x8xf32> to vector<8xf32>
    %36 = vector.shape_cast %35 : vector<8xf32> to vector<8x1xf32>
    %37 = vector.broadcast %36 : vector<8x1xf32> to vector<8x8xf32>
    %38 = arith.subf %34, %37 : vector<8x8xf32>
    %39 = math.exp %38 : vector<8x8xf32>
    %cst_16 = arith.constant dense<0.000000e+00> : vector<8xf32>
    %40 = vector.multi_reduction <add>, %39, %cst_16 [1] : vector<8x8xf32> to vector<8xf32>
    %41 = vector.shape_cast %40 : vector<8xf32> to vector<8x1xf32>
    %42 = tpu.reciprocal %41 {approx = true} : vector<8x1xf32> -> vector<8x1xf32>
    %43 = vector.broadcast %42 : vector<8x1xf32> to vector<8x8xf32>
    %44 = arith.mulf %39, %43 : vector<8x8xf32>
    %cst_17 = arith.constant dense<0.000000e+00> : vector<8x8xf32>
    %45 = tpu.matmul %44, %31, %cst_17 {dimension_numbers = #tpu.dot_dimension_numbers<[1], [0], [0], [1], [0, 0, 1, 1], [], []>} : vector<8x8xf32>, vector<8x8xf32>, vector<8x8xf32> -> vector<8x8xf32>
    %46 = vector.extract_strided_slice %6 {offsets = [0, 16], sizes = [8, 8], strides = [1, 1]} : vector<8x32xf32> to vector<8x8xf32>
    %47 = vector.extract_strided_slice %7 {offsets = [0, 16], sizes = [8, 8], strides = [1, 1]} : vector<8x32xf32> to vector<8x8xf32>
    %48 = vector.extract_strided_slice %8 {offsets = [0, 16], sizes = [8, 8], strides = [1, 1]} : vector<8x32xf32> to vector<8x8xf32>
    %cst_18 = arith.constant dense<0.000000e+00> : vector<8x8xf32>
    %49 = tpu.matmul %46, %47, %cst_18 {dimension_numbers = #tpu.dot_dimension_numbers<[1], [1], [0], [0], [0, 0, 1, 0], [], []>} : vector<8x8xf32>, vector<8x8xf32>, vector<8x8xf32> -> vector<8x8xf32>
    %cst_19 = arith.constant -1.000000e+30 : f32
    %50 = vector.broadcast %cst_19 : f32 to vector<8x8xf32>
    %51 = arith.select %11, %49, %50 : vector<8x8xi1>, vector<8x8xf32>
    %cst_20 = arith.constant dense<0xFF800000> : vector<8xf32>
    %52 = vector.multi_reduction <maximumf>, %51, %cst_20 [1] : vector<8x8xf32> to vector<8xf32>
    %53 = vector.shape_cast %52 : vector<8xf32> to vector<8x1xf32>
    %54 = vector.broadcast %53 : vector<8x1xf32> to vector<8x8xf32>
    %55 = arith.subf %51, %54 : vector<8x8xf32>
    %56 = math.exp %55 : vector<8x8xf32>
    %cst_21 = arith.constant dense<0.000000e+00> : vector<8xf32>
    %57 = vector.multi_reduction <add>, %56, %cst_21 [1] : vector<8x8xf32> to vector<8xf32>
    %58 = vector.shape_cast %57 : vector<8xf32> to vector<8x1xf32>
    %59 = tpu.reciprocal %58 {approx = true} : vector<8x1xf32> -> vector<8x1xf32>
    %60 = vector.broadcast %59 : vector<8x1xf32> to vector<8x8xf32>
    %61 = arith.mulf %56, %60 : vector<8x8xf32>
    %cst_22 = arith.constant dense<0.000000e+00> : vector<8x8xf32>
    %62 = tpu.matmul %61, %48, %cst_22 {dimension_numbers = #tpu.dot_dimension_numbers<[1], [0], [0], [1], [0, 0, 1, 1], [], []>} : vector<8x8xf32>, vector<8x8xf32>, vector<8x8xf32> -> vector<8x8xf32>
    %63 = vector.extract_strided_slice %6 {offsets = [0, 24], sizes = [8, 8], strides = [1, 1]} : vector<8x32xf32> to vector<8x8xf32>
    %64 = vector.extract_strided_slice %7 {offsets = [0, 24], sizes = [8, 8], strides = [1, 1]} : vector<8x32xf32> to vector<8x8xf32>
    %65 = vector.extract_strided_slice %8 {offsets = [0, 24], sizes = [8, 8], strides = [1, 1]} : vector<8x32xf32> to vector<8x8xf32>
    %cst_23 = arith.constant dense<0.000000e+00> : vector<8x8xf32>
    %66 = tpu.matmul %63, %64, %cst_23 {dimension_numbers = #tpu.dot_dimension_numbers<[1], [1], [0], [0], [0, 0, 1, 0], [], []>} : vector<8x8xf32>, vector<8x8xf32>, vector<8x8xf32> -> vector<8x8xf32>
    %cst_24 = arith.constant -1.000000e+30 : f32
    %67 = vector.broadcast %cst_24 : f32 to vector<8x8xf32>
    %68 = arith.select %11, %66, %67 : vector<8x8xi1>, vector<8x8xf32>
    %cst_25 = arith.constant dense<0xFF800000> : vector<8xf32>
    %69 = vector.multi_reduction <maximumf>, %68, %cst_25 [1] : vector<8x8xf32> to vector<8xf32>
    %70 = vector.shape_cast %69 : vector<8xf32> to vector<8x1xf32>
    %71 = vector.broadcast %70 : vector<8x1xf32> to vector<8x8xf32>
    %72 = arith.subf %68, %71 : vector<8x8xf32>
    %73 = math.exp %72 : vector<8x8xf32>
    %cst_26 = arith.constant dense<0.000000e+00> : vector<8xf32>
    %74 = vector.multi_reduction <add>, %73, %cst_26 [1] : vector<8x8xf32> to vector<8xf32>
    %75 = vector.shape_cast %74 : vector<8xf32> to vector<8x1xf32>
    %76 = tpu.reciprocal %75 {approx = true} : vector<8x1xf32> -> vector<8x1xf32>
    %77 = vector.broadcast %76 : vector<8x1xf32> to vector<8x8xf32>
    %78 = arith.mulf %73, %77 : vector<8x8xf32>
    %cst_27 = arith.constant dense<0.000000e+00> : vector<8x8xf32>
    %79 = tpu.matmul %78, %65, %cst_27 {dimension_numbers = #tpu.dot_dimension_numbers<[1], [0], [0], [1], [0, 0, 1, 1], [], []>} : vector<8x8xf32>, vector<8x8xf32>, vector<8x8xf32> -> vector<8x8xf32>
    %80 = tpu.concatenate %28, %45, %62, %79 in 1 : vector<8x8xf32>, vector<8x8xf32>, vector<8x8xf32>, vector<8x8xf32> -> vector<8x32xf32>
    %cst_28 = arith.constant dense<0.000000e+00> : vector<8x32xf32>
    %81 = tpu.matmul %80, %3, %cst_28 {dimension_numbers = #tpu.dot_dimension_numbers<[1], [0], [0], [1], [0, 0, 1, 1], [], []>} : vector<8x32xf32>, vector<32x32xf32>, vector<8x32xf32> -> vector<8x32xf32>
    %82 = vector.broadcast %4 : vector<1x32xf32> to vector<8x32xf32>
    %83 = arith.addf %81, %82 : vector<8x32xf32>
    %c0_29 = arith.constant 0 : index
    %c0_30 = arith.constant 0 : index
    %c0_31 = arith.constant 0 : index
    %84 = vector.load %arg5[%c0_29, %c0_30, %c0_31] : memref<1x8x32xf32, #tpu.memory_space<vmem>>, vector<1x8x32xf32>
    %85 = vector.shape_cast %84 : vector<1x8x32xf32> to vector<8x32xf32>
    %86 = vector.shape_cast %83 : vector<8x32xf32> to vector<1x8x32xf32>
    tpu.vector_store %arg5[%c0_29, %c0_30, %c0_31], %86 {strides = array<i32>} : memref<1x8x32xf32, #tpu.memory_space<vmem>>, vector<1x8x32xf32>,
    return
  }
  func.func @transform_0(%arg0: i32) -> (i32, i32, i32) {
    %c0_i32 = arith.constant 0 : i32
    %c0_i32_0 = arith.constant 0 : i32
    %c0_i32_1 = arith.constant 0 : i32
    return %arg0, %c0_i32, %c0_i32_0 : i32, i32, i32
  }
  func.func @transform_1(%arg0: i32) -> (i32, i32) {
    %c0_i32 = arith.constant 0 : i32
    %c0_i32_0 = arith.constant 0 : i32
    %c0_i32_1 = arith.constant 0 : i32
    return %c0_i32, %c0_i32_0 : i32, i32
  }
  func.func @transform_2(%arg0: i32) -> (i32, i32) {
    %c0_i32 = arith.constant 0 : i32
    %c0_i32_0 = arith.constant 0 : i32
    %c0_i32_1 = arith.constant 0 : i32
    return %c0_i32, %c0_i32_0 : i32, i32
  }
  func.func @transform_3(%arg0: i32) -> (i32, i32) {
    %c0_i32 = arith.constant 0 : i32
    %c0_i32_0 = arith.constant 0 : i32
    %c0_i32_1 = arith.constant 0 : i32
    return %c0_i32, %c0_i32_0 : i32, i32
  }
  func.func @transform_4(%arg0: i32) -> (i32, i32, i32) {
    %c0_i32 = arith.constant 0 : i32
    %c0_i32_0 = arith.constant 0 : i32
    %c0_i32_1 = arith.constant 0 : i32
    return %arg0, %c0_i32, %c0_i32_0 : i32, i32, i32
  }
}

</mosaic_0001>

<llo_original>
// kernel: tpu_custom_call.1
$region0: #{tpu_custom_call.1}
  #allocation0 [shape = 'u32[]', space=smem, size = 0x4, offset = 0x4, fixed_abs, tag = 'smem constant byte address 0x4 - core index']
  #allocation1 [shape = 'u32[144,128]{1,0:T(1,128)}', space=vmem, size = 0x12000, scoped, tag = 'internal scratch']
  %s0 = inlined_call_operand.hbm [shape: f32[2,8,32], index: 0, kind: input, shape index: {}]
  %s1 = inlined_call_operand.hbm [shape: f32[32,96], index: 1, kind: input, shape index: {}]
  %s2 = inlined_call_operand.hbm [shape: f32[32,32], index: 2, kind: input, shape index: {}]
  %s3 = inlined_call_operand.vmem [shape: f32[1,32], index: 3, kind: input, shape index: {}]
  %s4 = inlined_call_operand.hbm [shape: f32[2,8,32], index: 4, kind: output, shape index: {}]
  %s5 = sld [smem:[#allocation0]]
  $region61: #{tpu_custom_call.1} parent=0
    _
  %s7 = ssub.s32 1, %s5
  %s8 = scalar_select 0, %s7, %s5
  $region1: #{tpu_custom_call.1} parent=0
    #allocation2 [shape = 'u8[8192]{0}', space=vmem, size = 0x2000, scoped, tag = 'input window, operand 0']
    #allocation3 [shape = 's32[2]{0}', space=sflag, size = 0x8, scoped, tag = 'scoped memory for tpu_custom_call.1']
    #allocation4 [shape = 's32[2]{0}', space=sflag, size = 0x8, scoped, tag = 'scoped memory for tpu_custom_call.1']
    #allocation5 [shape = 'u8[16384]{0}', space=vmem, size = 0x4000, scoped, tag = 'input window, operand 1, single buffered']
    #allocation6 [shape = 's32[1]{0}', space=sflag, size = 0x4, scoped, tag = 'scoped memory for tpu_custom_call.1']
    #allocation7 [shape = 'u8[16384]{0}', space=vmem, size = 0x4000, scoped, tag = 'input window, operand 2, single buffered']
    #allocation8 [shape = 'u8[8192]{0}', space=vmem, size = 0x2000, scoped, tag = 'output window, operand 0']
    %9 = vsyncpa [#allocation3], 0
    %s10 = scalar_lea.sflag [#allocation3], 1
    %11 = vsyncpa %s10, 0
    %12 = vsyncpa [#allocation6], 0
    %13 = vsyncpa [#allocation4], 0
    %s14 = scalar_lea.sflag [#allocation4], 1
    %15 = vsyncpa %s14, 0
    loop: start=0, step=1, limit=4
    $region2: #{tpu_custom_call.1} parent=1 // loop_pre_header
      _
    $region3: #{tpu_custom_call.1} parent=1 // loop_header
      %s17 = sphi 0, %s21
      %p18 = scmp.ge.s32.totalorder %s17, 4
      %s27 = sphi 0, %s29
      %s30 = sphi 0, %s27
      %s31 = sphi 0, %s30
      %s47 = sphi 0, %s31
      %s51 = sphi 0, %s51
      %s53 = sphi 0, %s51
      %s54 = sphi 0, %s53
      %s68 = sphi 0, %s54
      %s72 = sphi 0, %s72
      %s74 = sphi 0, %s72
      %s75 = sphi 0, %s74
      %s89 = sphi 0, %s75
      %s93 = sphi 0, %s93
      %s95 = sphi 0, %s93
      %s96 = sphi 0, %s95
      %s110 = sphi 0, %s96
      %s116 = sphi 0, %s118
      %s119 = sphi 0, %s116
      %s120 = sphi 0, %s119
      %s136 = sphi 0, %s120
    $region4: #{tpu_custom_call.1} parent=1 // loop_header_branch
      %20 = sbr.rel (%p18) target = $region8
    $region5: #{tpu_custom_call.1} parent=1 // loop_body
      %s22 = ssub.s32 %s17, 1
      %s23 = ssub.s32 %s17, 2
      %s24 = sadd.s32 %s17, 1
      %s25 = ssub.s32 %s17, %s24
      %p26 = scmp.eq.s32.totalorder %s25, 0
      %s28 = sadd.s32 %s27, 1
      %s29 = scalar_select %p26, %s27, %s28
      %p32 = pneg %p26
      %p33 = scmp.eq.s32.totalorder %s17, 1
      %p34 = por %p32, %p33
      %p35 = scmp.ne.s32.totalorder %s27, %s30
      %p36 = scmp.eq.s32.totalorder %s17, 0
      %p37 = por %p35, %p36
      %p38 = scmp.ne.s32.totalorder %s27, %s30
      %p39 = scmp.eq.s32.totalorder %s22, 1
      %p40 = por %p38, %p39
      %p41 = scmp.ne.s32.totalorder %s30, %s31
      %p42 = scmp.eq.s32.totalorder %s22, 0
      %p43 = por %p41, %p42
      %p44 = scmp.ne.s32.totalorder %s30, %s31
      %p45 = scmp.eq.s32.totalorder %s23, 1
      %p46 = por %p44, %p45
      %p48 = scmp.ne.s32.totalorder %s31, %s47
      %p49 = scmp.eq.s32.totalorder %s23, 0
      %p50 = por %p48, %p49
      %s52 = sadd.s32 %s51, 1
      %p55 = scmp.eq.s32.totalorder %s17, 1
      %p56 = scmp.ne.s32.totalorder %s51, %s53
      %p57 = scmp.eq.s32.totalorder %s17, 0
      %p58 = por %p56, %p57
      %p59 = scmp.ne.s32.totalorder %s51, %s53
      %p60 = scmp.eq.s32.totalorder %s22, 1
      %p61 = por %p59, %p60
      %p62 = scmp.ne.s32.totalorder %s53, %s54
      %p63 = scmp.eq.s32.totalorder %s22, 0
      %p64 = por %p62, %p63
      %p65 = scmp.ne.s32.totalorder %s53, %s54
      %p66 = scmp.eq.s32.totalorder %s23, 1
      %p67 = por %p65, %p66
      %p69 = scmp.ne.s32.totalorder %s54, %s68
      %p70 = scmp.eq.s32.totalorder %s23, 0
      %p71 = por %p69, %p70
      %s73 = sadd.s32 %s72, 1
      %p76 = scmp.eq.s32.totalorder %s17, 1
      %p77 = scmp.ne.s32.totalorder %s72, %s74
      %p78 = scmp.eq.s32.totalorder %s17, 0
      %p79 = por %p77, %p78
      %p80 = scmp.ne.s32.totalorder %s72, %s74
      %p81 = scmp.eq.s32.totalorder %s22, 1
      %p82 = por %p80, %p81
      %p83 = scmp.ne.s32.totalorder %s74, %s75
      %p84 = scmp.eq.s32.totalorder %s22, 0
      %p85 = por %p83, %p84
      %p86 = scmp.ne.s32.totalorder %s74, %s75
      %p87 = scmp.eq.s32.totalorder %s23, 1
      %p88 = por %p86, %p87
      %p90 = scmp.ne.s32.totalorder %s75, %s89
      %p91 = scmp.eq.s32.totalorder %s23, 0
      %p92 = por %p90, %p91
      %s94 = sadd.s32 %s93, 1
      %p97 = scmp.eq.s32.totalorder %s17, 1
      %p98 = scmp.ne.s32.totalorder %s93, %s95
      %p99 = scmp.eq.s32.totalorder %s17, 0
      %p100 = por %p98, %p99
      %p101 = scmp.ne.s32.totalorder %s93, %s95
      %p102 = scmp.eq.s32.totalorder %s22, 1
      %p103 = por %p101, %p102
      %p104 = scmp.ne.s32.totalorder %s95, %s96
      %p105 = scmp.eq.s32.totalorder %s22, 0
      %p106 = por %p104, %p105
      %p107 = scmp.ne.s32.totalorder %s95, %s96
      %p108 = scmp.eq.s32.totalorder %s23, 1
      %p109 = por %p107, %p108
      %p111 = scmp.ne.s32.totalorder %s96, %s110
      %p112 = scmp.eq.s32.totalorder %s23, 0
      %p113 = por %p111, %p112
      %s114 = ssub.s32 %s17, %s24
      %p115 = scmp.eq.s32.totalorder %s114, 0
      %s117 = sadd.s32 %s116, 1
      %s118 = scalar_select %p115, %s116, %s117
      %p121 = pneg %p115
      %p122 = scmp.eq.s32.totalorder %s17, 1
      %p123 = por %p121, %p122
      %p124 = scmp.ne.s32.totalorder %s116, %s119
      %p125 = scmp.eq.s32.totalorder %s17, 0
      %p126 = por %p124, %p125
      %p127 = scmp.ne.s32.totalorder %s116, %s119
      %p128 = scmp.eq.s32.totalorder %s22, 1
      %p129 = por %p127, %p128
      %p130 = scmp.ne.s32.totalorder %s119, %s120
      %p131 = scmp.eq.s32.totalorder %s22, 0
      %p132 = por %p130, %p131
      %p133 = scmp.ne.s32.totalorder %s119, %s120
      %p134 = scmp.eq.s32.totalorder %s23, 1
      %p135 = por %p133, %p134
      %p137 = scmp.ne.s32.totalorder %s120, %s136
      %p138 = scmp.eq.s32.totalorder %s23, 0
      %p139 = por %p137, %p138
      %p140 = scmp.le.s32.totalorder 1, %s17
      %p141 = scmp.lt.s32.totalorder %s17, 3
      %p142 = pnand %p140, %p141
      %p143 = pneg %p142
      // Predicated region
      $region9: #{tpu_custom_call.1} parent=5 // pred_check
        _
      $region10: #{tpu_custom_call.1} parent=5 // pred_check_branch
        %145 = sbr.rel (%p142) target = $region12
      $region11: #{tpu_custom_call.1} parent=5 // pred_region
        %s146 = ssub.s32 %s17, 1
        // Predicated region
        $region13: #{tpu_custom_call.1} parent=11 // pred_check
          %p147 = pneg %p64
        $region14: #{tpu_custom_call.1} parent=11 // pred_check_branch
          %149 = sbr.rel (%p147) target = $region16
        $region15: #{tpu_custom_call.1} parent=11 // pred_region
          %s151 = ssub.s32 512, 512
          %152 = vsyncadd [#allocation6], %s151
          %s153 = sshll.u32 [#allocation5], 4
          %s154 = int_to_ptr.vmem [resolvable:$true] %s153
          %159 = dma.hbm_to_vmem [thread:$0]  %s1, 512, %s154, [#allocation6], 128, 128, 8
        $region16: #{tpu_custom_call.1} parent=11 // pred_fallthru
          _
        // Predicated region
        $region17: #{tpu_custom_call.1} parent=11 // pred_check
          %p160 = pneg %p85
        $region18: #{tpu_custom_call.1} parent=11 // pred_check_branch
          %162 = sbr.rel (%p160) target = $region20
        $region19: #{tpu_custom_call.1} parent=11 // pred_region
          %s164 = ssub.s32 512, 512
          %165 = vsyncadd [#allocation6], %s164
          %s166 = sshll.u32 [#allocation7], 4
          %s167 = int_to_ptr.vmem [resolvable:$true] %s166
          %172 = dma.hbm_to_vmem [thread:$0]  %s2, 512, %s167, [#allocation6], 128, 128, 8
        $region20: #{tpu_custom_call.1} parent=11 // pred_fallthru
          _
        // Predicated region
        $region21: #{tpu_custom_call.1} parent=11 // pred_check
          %p173 = pneg %p106
        $region22: #{tpu_custom_call.1} parent=11 // pred_check_branch
          %175 = sbr.rel (%p173) target = $region24
        $region23: #{tpu_custom_call.1} parent=11 // pred_region
          _
        $region24: #{tpu_custom_call.1} parent=11 // pred_fallthru
          _
      $region12: #{tpu_custom_call.1} parent=5 // pred_fallthru
        _
      %p176 = scmp.lt.s32.totalorder %s17, 2
      // Predicated region
      $region25: #{tpu_custom_call.1} parent=5 // pred_check
        %p177 = pneg %p176
      $region26: #{tpu_custom_call.1} parent=5 // pred_check_branch
        %179 = sbr.rel (%p177) target = $region28
      $region27: #{tpu_custom_call.1} parent=5 // pred_region
        // Predicated region
        $region29: #{tpu_custom_call.1} parent=27 // pred_check
          %p180 = pneg %p37
        $region30: #{tpu_custom_call.1} parent=27 // pred_check_branch
          %182 = sbr.rel (%p180) target = $region32
        $region31: #{tpu_custom_call.1} parent=27 // pred_region
          %s183 = sand.u32 %s27, 1
          %s184 = scalar_lea.sflag [#allocation3], %s183
          %s185 = sand.u32 %s27, 1
          %s186 = smul.addr %s185, 8
          %s187 = scalar_lea.vmem [#allocation2], %s186
          %s189 = ssub.s32 128, 128
          %190 = vsyncadd %s184, %s189
          %s191 = smul.addr %s17, 128
          %s192 = scalar_lea.hbm %s0, %s191
          %s194 = sshll.u32 %s187, 4
          %s195 = int_to_ptr.vmem [resolvable:$true] %s194
          %197 = dma.hbm_to_vmem [thread:$0]  %s192, 128, %s195, %s184
        $region32: #{tpu_custom_call.1} parent=27 // pred_fallthru
          _
      $region28: #{tpu_custom_call.1} parent=5 // pred_fallthru
        _
      %p198 = scmp.le.s32.totalorder 1, %s17
      %p199 = scmp.lt.s32.totalorder %s17, 3
      %p200 = pnand %p198, %p199
      %p201 = pneg %p200
      // Predicated region
      $region33: #{tpu_custom_call.1} parent=5 // pred_check
        _
      $region34: #{tpu_custom_call.1} parent=5 // pred_check_branch
        %203 = sbr.rel (%p200) target = $region36
      $region35: #{tpu_custom_call.1} parent=5 // pred_region
        %s204 = ssub.s32 %s17, 1
        %s205 = sand.u32 %s30, 1
        %s206 = scalar_lea.sflag [#allocation3], %s205
        %s207 = sand.u32 %s30, 1
        %s208 = smul.addr %s207, 8
        %s209 = scalar_lea.vmem [#allocation2], %s208
        // Predicated region
        $region37: #{tpu_custom_call.1} parent=35 // pred_check
          %p210 = pneg %p43
        $region38: #{tpu_custom_call.1} parent=35 // pred_check_branch
          %212 = sbr.rel (%p210) target = $region40
        $region39: #{tpu_custom_call.1} parent=35 // pred_region
          %213 = dma.done %s206, 128
        $region40: #{tpu_custom_call.1} parent=35 // pred_fallthru
          _
        // Predicated region
        $region41: #{tpu_custom_call.1} parent=35 // pred_check
          %p214 = pneg %p64
        $region42: #{tpu_custom_call.1} parent=35 // pred_check_branch
          %216 = sbr.rel (%p214) target = $region44
        $region43: #{tpu_custom_call.1} parent=35 // pred_region
          %217 = dma.done [#allocation6], 512
        $region44: #{tpu_custom_call.1} parent=35 // pred_fallthru
          _
        // Predicated region
        $region45: #{tpu_custom_call.1} parent=35 // pred_check
          %p218 = pneg %p85
        $region46: #{tpu_custom_call.1} parent=35 // pred_check_branch
          %220 = sbr.rel (%p218) target = $region48
        $region47: #{tpu_custom_call.1} parent=35 // pred_region
          %221 = dma.done [#allocation6], 512
        $region48: #{tpu_custom_call.1} parent=35 // pred_fallthru
          _
        %s222 = sand.u32 %s30, 1
        %s223 = scalar_lea.sflag [#allocation3], %s222
        %s224 = sand.u32 %s30, 1
        %s225 = smul.addr %s224, 8
        %s226 = scalar_lea.vmem [#allocation2], %s225
        %p227 = pneg %p43
        %p228 = pneg %p40
        %p229 = pneg %p64
        %p230 = pneg %p61
        %p231 = pneg %p85
        %p232 = pneg %p82
        %p233 = pneg %p106
        %p234 = pneg %p103
        %p235 = pneg %p132
        %p236 = pneg %p129
        %s237 = sand.u32 %s119, 1
        %s238 = scalar_lea.sflag [#allocation4], %s237
        %s239 = sand.u32 %s119, 1
        %s240 = smul.addr %s239, 8
        %s241 = scalar_lea.vmem [#allocation8], %s240
        %v242 = vld [vmem:[%s209] sm:$0xff]
        %v243 = vld [vmem:[#allocation5] sm:$0xff]
        %v244 = vld [vmem:[#allocation5 + $0x8] sm:$0xff]
        %v245 = vld [vmem:[#allocation5 + $0x10] sm:$0xff]
        %v246 = vld [vmem:[#allocation5 + $0x18] sm:$0xff]
        %v247 = vld [vmem:[#allocation7] sm:$0xff]
        %v248 = vld [vmem:[#allocation7 + $0x8] sm:$0xff]
        %v249 = vld [vmem:[#allocation7 + $0x10] sm:$0xff]
        %v250 = vld [vmem:[#allocation7 + $0x18] sm:$0xff]
        %v251 = vld [vmem:[%s3] sm:$0x1]
        %vm252 = vcmask 261120
        %v254 = vsel %vm252, %v242, 0
        %256 = vmatprep.subr.mxu0 0.0
        %257 = vmatpush1.msra.mxu0 %v243
        %258 = vmatprep.subr.mxu0 0.0
        %259 = vmatpush1.msra.mxu0 %v244
        %260 = vmatprep.subr.mxu0 0.0
        %261 = vmatpush1.msra.mxu0 %v245
        %262 = vmatprep.subr.mxu0 0.0
        %263 = vmatpush1.msra.mxu0 %v246
        %264 = vmatprep.subr.mxu0 0.0
        %265 = vmatpush1.msra.mxu0 0.0
        %266 = vmatprep.subr.mxu0 0.0
        %267 = vmatpush1.msra.mxu0 0.0
        %268 = vmatprep.subr.mxu0 0.0
        %269 = vmatpush1.msra.mxu0 0.0
        %270 = vmatprep.subr.mxu0 0.0
        %271 = vmatpush1.msra.mxu0 0.0
        %272 = vmatprep.subr.mxu0 0.0
        %273 = vmatpush1.msra.mxu0 0.0
        %274 = vmatprep.subr.mxu0 0.0
        %275 = vmatpush1.msra.mxu0 0.0
        %276 = vmatprep.subr.mxu0 0.0
        %277 = vmatpush1.msra.mxu0 0.0
        %278 = vmatprep.subr.mxu0 0.0
        %279 = vmatpush1.msra.mxu0 0.0
        %280 = vmatprep.subr.mxu0 0.0
        %281 = vmatpush1.msra.mxu0 0.0
        %282 = vmatprep.subr.mxu0 0.0
        %283 = vmatpush1.msra.mxu0 0.0
        %284 = vmatprep.subr.mxu0 0.0
        %285 = vmatpush1.msra.mxu0 0.0
        %286 = vmatprep.subr.mxu0 0.0
        %287 = vmatpush1.msra.mxu0 0.0
        %288 = vmatprep.subr.mxu0 0.0
        %289 = vmatpush1.msra.mxu0 0.0
        %290 = vmatprep.subr.mxu0 0.0
        %291 = vmatpush1.msra.mxu0 0.0
        %292 = vmatprep.subr.mxu0 0.0
        %293 = vmatpush1.msra.mxu0 0.0
        %294 = vmatprep.subr.mxu0 0.0
        %295 = vmatpush1.msra.mxu0 0.0
        %296 = vmatprep.subr.mxu0 0.0
        %297 = vmatpush1.msra.mxu0 0.0
        %298 = vmatprep.subr.mxu0 0.0
        %299 = vmatpush1.msra.mxu0 0.0
        %300 = vmatprep.subr.mxu0 0.0
        %301 = vmatpush1.msra.mxu0 0.0
        %302 = vmatprep.subr.mxu0 0.0
        %303 = vmatpush1.msra.mxu0 0.0
        %304 = vmatprep.subr.mxu0 0.0
        %305 = vmatpush1.msra.mxu0 0.0
        %306 = vmatprep.subr.mxu0 0.0
        %307 = vmatpush1.msra.mxu0 0.0
        %308 = vmatprep.subr.mxu0 0.0
        %309 = vmatpush1.msra.mxu0 0.0
        %310 = vmatprep.subr.mxu0 0.0
        %311 = vmatpush1.msra.mxu0 0.0
        %312 = vmatprep.subr.mxu0 0.0
        %313 = vmatpush1.msra.mxu0 0.0
        %314 = vmatprep.subr.mxu0 0.0
        %315 = vmatpush1.msra.mxu0 0.0
        %316 = vmatprep.subr.mxu0 0.0
        %317 = vmatpush1.msra.mxu0 0.0
        %318 = vmatprep.subr.mxu0 0.0
        %319 = vmatpush1.msra.mxu0 0.0
        %320 = vmatprep.mubr.f32.mxu0 0.0
        %321 = vmatmul.mubr.f32.gmra.mrb[0].mxu0 %v254
        %v322 = vpop.f32.mrb[0].mxu0
        %v323 = vadd.f32 0.0, %v322
        %v324 = vpop.f32.mrb[0].mxu0
        %325 = vdwg.mxu0
        %v326 = vlaneseq
        %v327 = vshrl.u32 %v326, 7
        %v328 = vlaneseq
        %v329 = vand.u32 %v328, 127
        %vm330 = vcmp.le.s32.totalorder %v329, %v327
        %332 = vrot.lane.b32.xlu0 %v323, 96
        %v333 = vpop.permute.xlu0 %332
        %vm334 = vcmask 64512
        %v335 = vsel %vm334, %v323, 0
        %v337 = vsel %vm334, %v333, 0
        %339 = vmatprep.subr.mxu0 0.0
        %340 = vmatpush1.xpose.msra.mxu0 %v337
        %341 = vmatprep.subr.mxu0 0.0
        %342 = vmatpush1.xpose.msra.mxu0 0.0
        %343 = vmatprep.subr.mxu0 0.0
        %344 = vmatpush1.xpose.msra.mxu0 0.0
        %345 = vmatprep.subr.mxu0 0.0
        %346 = vmatpush1.xpose.msra.mxu0 0.0
        %347 = vmatprep.subr.mxu0 0.0
        %348 = vmatpush1.xpose.msra.mxu0 0.0
        %349 = vmatprep.subr.mxu0 0.0
        %350 = vmatpush1.xpose.msra.mxu0 0.0
        %351 = vmatprep.subr.mxu0 0.0
        %352 = vmatpush1.xpose.msra.mxu0 0.0
        %353 = vmatprep.subr.mxu0 0.0
        %354 = vmatpush1.xpose.msra.mxu0 0.0
        %355 = vmatprep.subr.mxu0 0.0
        %356 = vmatpush1.xpose.msra.mxu0 0.0
        %357 = vmatprep.subr.mxu0 0.0
        %358 = vmatpush1.xpose.msra.mxu0 0.0
        %359 = vmatprep.subr.mxu0 0.0
        %360 = vmatpush1.xpose.msra.mxu0 0.0
        %361 = vmatprep.subr.mxu0 0.0
        %362 = vmatpush1.xpose.msra.mxu0 0.0
        %363 = vmatprep.subr.mxu0 0.0
        %364 = vmatpush1.xpose.msra.mxu0 0.0
        %365 = vmatprep.subr.mxu0 0.0
        %366 = vmatpush1.xpose.msra.mxu0 0.0
        %367 = vmatprep.subr.mxu0 0.0
        %368 = vmatpush1.xpose.msra.mxu0 0.0
        %369 = vmatprep.subr.mxu0 0.0
        %370 = vmatpush1.xpose.msra.mxu0 0.0
        %371 = vmatprep.subr.mxu0 0.0
        %372 = vmatpush1.xpose.msra.mxu0 0.0
        %373 = vmatprep.subr.mxu0 0.0
        %374 = vmatpush1.xpose.msra.mxu0 0.0
        %375 = vmatprep.subr.mxu0 0.0
        %376 = vmatpush1.xpose.msra.mxu0 0.0
        %377 = vmatprep.subr.mxu0 0.0
        %378 = vmatpush1.xpose.msra.mxu0 0.0
        %379 = vmatprep.subr.mxu0 0.0
        %380 = vmatpush1.xpose.msra.mxu0 0.0
        %381 = vmatprep.subr.mxu0 0.0
        %382 = vmatpush1.xpose.msra.mxu0 0.0
        %383 = vmatprep.subr.mxu0 0.0
        %384 = vmatpush1.xpose.msra.mxu0 0.0
        %385 = vmatprep.subr.mxu0 0.0
        %386 = vmatpush1.xpose.msra.mxu0 0.0
        %387 = vmatprep.subr.mxu0 0.0
        %388 = vmatpush1.xpose.msra.mxu0 0.0
        %389 = vmatprep.subr.mxu0 0.0
        %390 = vmatpush1.xpose.msra.mxu0 0.0
        %391 = vmatprep.subr.mxu0 0.0
        %392 = vmatpush1.xpose.msra.mxu0 0.0
        %393 = vmatprep.subr.mxu0 0.0
        %394 = vmatpush1.xpose.msra.mxu0 0.0
        %395 = vmatprep.subr.mxu0 0.0
        %396 = vmatpush1.xpose.msra.mxu0 0.0
        %397 = vmatprep.subr.mxu0 0.0
        %398 = vmatpush1.xpose.msra.mxu0 0.0
        %399 = vmatprep.subr.mxu0 0.0
        %400 = vmatpush1.xpose.msra.mxu0 0.0
        %401 = vmatprep.subr.mxu0 0.0
        %402 = vmatpush1.xpose.msra.mxu0 0.0
        %403 = vmatprep.mubr.f32.mxu0 0.0
        %404 = vmatmul.mubr.f32.gmra.mrb[0].mxu0 %v335
        %v405 = vpop.f32.mrb[0].mxu0
        %v406 = vadd.f32 0.0, %v405
        %v407 = vpop.f32.mrb[0].mxu0
        %408 = vdwg.mxu0
        %v409 = vsel %vm330, %v406, -1e+30
        %v410 = vsel %vm334, %v409, -inf
        %411 = vmax.xlane.f32.xlu0 %v410
        %v412 = vpop.xlane.xlu0 %411
        %v413 = vsub.f32 %v409, %v412
        %v414 = vmul.f32 %v413, 1.442695
        %v415 = vpow.pop %v414
        %v416 = vsel %vm334, %v415, 0.0
        %417 = vadd.xlane.f32.xlu0 %v416
        %v418 = vpop.xlane.xlu0 %417
        %v419 = vrcp.pop %v418
        %v420 = vmul.f32 %v415, %v419
        %421 = vrot.lane.b32.xlu0 %v323, 64
        %v422 = vpop.permute.xlu0 %421
        %v425 = vsel %vm334, %v420, 0
        %427 = vmatprep.subr.mxu0 0.0
        %428 = vmatpush1.msra.mxu0 %v422
        %429 = vmatprep.subr.mxu0 0.0
        %430 = vmatpush1.msra.mxu0 0.0
        %431 = vmatprep.subr.mxu0 0.0
        %432 = vmatpush1.msra.mxu0 0.0
        %433 = vmatprep.subr.mxu0 0.0
        %434 = vmatpush1.msra.mxu0 0.0
        %435 = vmatprep.subr.mxu0 0.0
        %436 = vmatpush1.msra.mxu0 0.0
        %437 = vmatprep.subr.mxu0 0.0
        %438 = vmatpush1.msra.mxu0 0.0
        %439 = vmatprep.subr.mxu0 0.0
        %440 = vmatpush1.msra.mxu0 0.0
        %441 = vmatprep.subr.mxu0 0.0
        %442 = vmatpush1.msra.mxu0 0.0
        %443 = vmatprep.subr.mxu0 0.0
        %444 = vmatpush1.msra.mxu0 0.0
        %445 = vmatprep.subr.mxu0 0.0
        %446 = vmatpush1.msra.mxu0 0.0
        %447 = vmatprep.subr.mxu0 0.0
        %448 = vmatpush1.msra.mxu0 0.0
        %449 = vmatprep.subr.mxu0 0.0
        %450 = vmatpush1.msra.mxu0 0.0
        %451 = vmatprep.subr.mxu0 0.0
        %452 = vmatpush1.msra.mxu0 0.0
        %453 = vmatprep.subr.mxu0 0.0
        %454 = vmatpush1.msra.mxu0 0.0
        %455 = vmatprep.subr.mxu0 0.0
        %456 = vmatpush1.msra.mxu0 0.0
        %457 = vmatprep.subr.mxu0 0.0
        %458 = vmatpush1.msra.mxu0 0.0
        %459 = vmatprep.subr.mxu0 0.0
        %460 = vmatpush1.msra.mxu0 0.0
        %461 = vmatprep.subr.mxu0 0.0
        %462 = vmatpush1.msra.mxu0 0.0
        %463 = vmatprep.subr.mxu0 0.0
        %464 = vmatpush1.msra.mxu0 0.0
        %465 = vmatprep.subr.mxu0 0.0
        %466 = vmatpush1.msra.mxu0 0.0
        %467 = vmatprep.subr.mxu0 0.0
        %468 = vmatpush1.msra.mxu0 0.0
        %469 = vmatprep.subr.mxu0 0.0
        %470 = vmatpush1.msra.mxu0 0.0
        %471 = vmatprep.subr.mxu0 0.0
        %472 = vmatpush1.msra.mxu0 0.0
        %473 = vmatprep.subr.mxu0 0.0
        %474 = vmatpush1.msra.mxu0 0.0
        %475 = vmatprep.subr.mxu0 0.0
        %476 = vmatpush1.msra.mxu0 0.0
        %477 = vmatprep.subr.mxu0 0.0
        %478 = vmatpush1.msra.mxu0 0.0
        %479 = vmatprep.subr.mxu0 0.0
        %480 = vmatpush1.msra.mxu0 0.0
        %481 = vmatprep.subr.mxu0 0.0
        %482 = vmatpush1.msra.mxu0 0.0
        %483 = vmatprep.subr.mxu0 0.0
        %484 = vmatpush1.msra.mxu0 0.0
        %485 = vmatprep.subr.mxu0 0.0
        %486 = vmatpush1.msra.mxu0 0.0
        %487 = vmatprep.subr.mxu0 0.0
        %488 = vmatpush1.msra.mxu0 0.0
        %489 = vmatprep.subr.mxu0 0.0
        %490 = vmatpush1.msra.mxu0 0.0
        %491 = vmatprep.mubr.f32.mxu0 0.0
        %492 = vmatmul.mubr.f32.gmra.mrb[0].mxu0 %v425
        %v493 = vpop.f32.mrb[0].mxu0
        %v494 = vadd.f32 0.0, %v493
        %v495 = vpop.f32.mrb[0].mxu0
        %496 = vdwg.mxu0
        %497 = vrot.lane.b32.xlu0 %v323, 120
        %v498 = vpop.permute.xlu0 %497
        %499 = vrot.lane.b32.xlu0 %v323, 88
        %v500 = vpop.permute.xlu0 %499
        %v501 = vsel %vm334, %v498, 0
        %v503 = vsel %vm334, %v500, 0
        %505 = vmatprep.subr.mxu0 0.0
        %506 = vmatpush1.xpose.msra.mxu0 %v503
        %507 = vmatprep.subr.mxu0 0.0
        %508 = vmatpush1.xpose.msra.mxu0 0.0
        %509 = vmatprep.subr.mxu0 0.0
        %510 = vmatpush1.xpose.msra.mxu0 0.0
        %511 = vmatprep.subr.mxu0 0.0
        %512 = vmatpush1.xpose.msra.mxu0 0.0
        %513 = vmatprep.subr.mxu0 0.0
        %514 = vmatpush1.xpose.msra.mxu0 0.0
        %515 = vmatprep.subr.mxu0 0.0
        %516 = vmatpush1.xpose.msra.mxu0 0.0
        %517 = vmatprep.subr.mxu0 0.0
        %518 = vmatpush1.xpose.msra.mxu0 0.0
        %519 = vmatprep.subr.mxu0 0.0
        %520 = vmatpush1.xpose.msra.mxu0 0.0
        %521 = vmatprep.subr.mxu0 0.0
        %522 = vmatpush1.xpose.msra.mxu0 0.0
        %523 = vmatprep.subr.mxu0 0.0
        %524 = vmatpush1.xpose.msra.mxu0 0.0
        %525 = vmatprep.subr.mxu0 0.0
        %526 = vmatpush1.xpose.msra.mxu0 0.0
        %527 = vmatprep.subr.mxu0 0.0
        %528 = vmatpush1.xpose.msra.mxu0 0.0
        %529 = vmatprep.subr.mxu0 0.0
        %530 = vmatpush1.xpose.msra.mxu0 0.0
        %531 = vmatprep.subr.mxu0 0.0
        %532 = vmatpush1.xpose.msra.mxu0 0.0
        %533 = vmatprep.subr.mxu0 0.0
        %534 = vmatpush1.xpose.msra.mxu0 0.0
        %535 = vmatprep.subr.mxu0 0.0
        %536 = vmatpush1.xpose.msra.mxu0 0.0
        %537 = vmatprep.subr.mxu0 0.0
        %538 = vmatpush1.xpose.msra.mxu0 0.0
        %539 = vmatprep.subr.mxu0 0.0
        %540 = vmatpush1.xpose.msra.mxu0 0.0
        %541 = vmatprep.subr.mxu0 0.0
        %542 = vmatpush1.xpose.msra.mxu0 0.0
        %543 = vmatprep.subr.mxu0 0.0
        %544 = vmatpush1.xpose.msra.mxu0 0.0
        %545 = vmatprep.subr.mxu0 0.0
        %546 = vmatpush1.xpose.msra.mxu0 0.0
        %547 = vmatprep.subr.mxu0 0.0
        %548 = vmatpush1.xpose.msra.mxu0 0.0
        %549 = vmatprep.subr.mxu0 0.0
        %550 = vmatpush1.xpose.msra.mxu0 0.0
        %551 = vmatprep.subr.mxu0 0.0
        %552 = vmatpush1.xpose.msra.mxu0 0.0
        %553 = vmatprep.subr.mxu0 0.0
        %554 = vmatpush1.xpose.msra.mxu0 0.0
        %555 = vmatprep.subr.mxu0 0.0
        %556 = vmatpush1.xpose.msra.mxu0 0.0
        %557 = vmatprep.subr.mxu0 0.0
        %558 = vmatpush1.xpose.msra.mxu0 0.0
        %559 = vmatprep.subr.mxu0 0.0
        %560 = vmatpush1.xpose.msra.mxu0 0.0
        %561 = vmatprep.subr.mxu0 0.0
        %562 = vmatpush1.xpose.msra.mxu0 0.0
        %563 = vmatprep.subr.mxu0 0.0
        %564 = vmatpush1.xpose.msra.mxu0 0.0
        %565 = vmatprep.subr.mxu0 0.0
        %566 = vmatpush1.xpose.msra.mxu0 0.0
        %567 = vmatprep.subr.mxu0 0.0
        %568 = vmatpush1.xpose.msra.mxu0 0.0
        %569 = vmatprep.mubr.f32.mxu0 0.0
        %570 = vmatmul.mubr.f32.gmra.mrb[0].mxu0 %v501
        %v571 = vpop.f32.mrb[0].mxu0
        %v572 = vadd.f32 0.0, %v571
        %v573 = vpop.f32.mrb[0].mxu0
        %574 = vdwg.mxu0
        %v575 = vsel %vm330, %v572, -1e+30
        %v576 = vsel %vm334, %v575, -inf
        %577 = vmax.xlane.f32.xlu0 %v576
        %v578 = vpop.xlane.xlu0 %577
        %v579 = vsub.f32 %v575, %v578
        %v580 = vmul.f32 %v579, 1.442695
        %v581 = vpow.pop %v580
        %v582 = vsel %vm334, %v581, 0.0
        %583 = vadd.xlane.f32.xlu0 %v582
        %v584 = vpop.xlane.xlu0 %583
        %v585 = vrcp.pop %v584
        %v586 = vmul.f32 %v581, %v585
        %587 = vrot.lane.b32.xlu0 %v323, 56
        %v588 = vpop.permute.xlu0 %587
        %v591 = vsel %vm334, %v586, 0
        %593 = vmatprep.subr.mxu0 0.0
        %594 = vmatpush1.msra.mxu0 %v588
        %595 = vmatprep.subr.mxu0 0.0
        %596 = vmatpush1.msra.mxu0 0.0
        %597 = vmatprep.subr.mxu0 0.0
        %598 = vmatpush1.msra.mxu0 0.0
        %599 = vmatprep.subr.mxu0 0.0
        %600 = vmatpush1.msra.mxu0 0.0
        %601 = vmatprep.subr.mxu0 0.0
        %602 = vmatpush1.msra.mxu0 0.0
        %603 = vmatprep.subr.mxu0 0.0
        %604 = vmatpush1.msra.mxu0 0.0
        %605 = vmatprep.subr.mxu0 0.0
        %606 = vmatpush1.msra.mxu0 0.0
        %607 = vmatprep.subr.mxu0 0.0
        %608 = vmatpush1.msra.mxu0 0.0
        %609 = vmatprep.subr.mxu0 0.0
        %610 = vmatpush1.msra.mxu0 0.0
        %611 = vmatprep.subr.mxu0 0.0
        %612 = vmatpush1.msra.mxu0 0.0
        %613 = vmatprep.subr.mxu0 0.0
        %614 = vmatpush1.msra.mxu0 0.0
        %615 = vmatprep.subr.mxu0 0.0
        %616 = vmatpush1.msra.mxu0 0.0
        %617 = vmatprep.subr.mxu0 0.0
        %618 = vmatpush1.msra.mxu0 0.0
        %619 = vmatprep.subr.mxu0 0.0
        %620 = vmatpush1.msra.mxu0 0.0
        %621 = vmatprep.subr.mxu0 0.0
        %622 = vmatpush1.msra.mxu0 0.0
        %623 = vmatprep.subr.mxu0 0.0
        %624 = vmatpush1.msra.mxu0 0.0
        %625 = vmatprep.subr.mxu0 0.0
        %626 = vmatpush1.msra.mxu0 0.0
        %627 = vmatprep.subr.mxu0 0.0
        %628 = vmatpush1.msra.mxu0 0.0
        %629 = vmatprep.subr.mxu0 0.0
        %630 = vmatpush1.msra.mxu0 0.0
        %631 = vmatprep.subr.mxu0 0.0
        %632 = vmatpush1.msra.mxu0 0.0
        %633 = vmatprep.subr.mxu0 0.0
        %634 = vmatpush1.msra.mxu0 0.0
        %635 = vmatprep.subr.mxu0 0.0
        %636 = vmatpush1.msra.mxu0 0.0
        %637 = vmatprep.subr.mxu0 0.0
        %638 = vmatpush1.msra.mxu0 0.0
        %639 = vmatprep.subr.mxu0 0.0
        %640 = vmatpush1.msra.mxu0 0.0
        %641 = vmatprep.subr.mxu0 0.0
        %642 = vmatpush1.msra.mxu0 0.0
        %643 = vmatprep.subr.mxu0 0.0
        %644 = vmatpush1.msra.mxu0 0.0
        %645 = vmatprep.subr.mxu0 0.0
        %646 = vmatpush1.msra.mxu0 0.0
        %647 = vmatprep.subr.mxu0 0.0
        %648 = vmatpush1.msra.mxu0 0.0
        %649 = vmatprep.subr.mxu0 0.0
        %650 = vmatpush1.msra.mxu0 0.0
        %651 = vmatprep.subr.mxu0 0.0
        %652 = vmatpush1.msra.mxu0 0.0
        %653 = vmatprep.subr.mxu0 0.0
        %654 = vmatpush1.msra.mxu0 0.0
        %655 = vmatprep.subr.mxu0 0.0
        %656 = vmatpush1.msra.mxu0 0.0
        %657 = vmatprep.mubr.f32.mxu0 0.0
        %658 = vmatmul.mubr.f32.gmra.mrb[0].mxu0 %v591
        %v659 = vpop.f32.mrb[0].mxu0
        %v660 = vadd.f32 0.0, %v659
        %v661 = vpop.f32.mrb[0].mxu0
        %662 = vdwg.mxu0
        %663 = vrot.lane.b32.xlu0 %v323, 112
        %v664 = vpop.permute.xlu0 %663
        %665 = vrot.lane.b32.xlu0 %v323, 80
        %v666 = vpop.permute.xlu0 %665
        %v667 = vsel %vm334, %v664, 0
        %v669 = vsel %vm334, %v666, 0
        %671 = vmatprep.subr.mxu0 0.0
        %672 = vmatpush1.xpose.msra.mxu0 %v669
        %673 = vmatprep.subr.mxu0 0.0
        %674 = vmatpush1.xpose.msra.mxu0 0.0
        %675 = vmatprep.subr.mxu0 0.0
        %676 = vmatpush1.xpose.msra.mxu0 0.0
        %677 = vmatprep.subr.mxu0 0.0
        %678 = vmatpush1.xpose.msra.mxu0 0.0
        %679 = vmatprep.subr.mxu0 0.0
        %680 = vmatpush1.xpose.msra.mxu0 0.0
        %681 = vmatprep.subr.mxu0 0.0
        %682 = vmatpush1.xpose.msra.mxu0 0.0
        %683 = vmatprep.subr.mxu0 0.0
        %684 = vmatpush1.xpose.msra.mxu0 0.0
        %685 = vmatprep.subr.mxu0 0.0
        %686 = vmatpush1.xpose.msra.mxu0 0.0
        %687 = vmatprep.subr.mxu0 0.0
        %688 = vmatpush1.xpose.msra.mxu0 0.0
        %689 = vmatprep.subr.mxu0 0.0
        %690 = vmatpush1.xpose.msra.mxu0 0.0
        %691 = vmatprep.subr.mxu0 0.0
        %692 = vmatpush1.xpose.msra.mxu0 0.0
        %693 = vmatprep.subr.mxu0 0.0
        %694 = vmatpush1.xpose.msra.mxu0 0.0
        %695 = vmatprep.subr.mxu0 0.0
        %696 = vmatpush1.xpose.msra.mxu0 0.0
        %697 = vmatprep.subr.mxu0 0.0
        %698 = vmatpush1.xpose.msra.mxu0 0.0
        %699 = vmatprep.subr.mxu0 0.0
        %700 = vmatpush1.xpose.msra.mxu0 0.0
        %701 = vmatprep.subr.mxu0 0.0
        %702 = vmatpush1.xpose.msra.mxu0 0.0
        %703 = vmatprep.subr.mxu0 0.0
        %704 = vmatpush1.xpose.msra.mxu0 0.0
        %705 = vmatprep.subr.mxu0 0.0
        %706 = vmatpush1.xpose.msra.mxu0 0.0
        %707 = vmatprep.subr.mxu0 0.0
        %708 = vmatpush1.xpose.msra.mxu0 0.0
        %709 = vmatprep.subr.mxu0 0.0
        %710 = vmatpush1.xpose.msra.mxu0 0.0
        %711 = vmatprep.subr.mxu0 0.0
        %712 = vmatpush1.xpose.msra.mxu0 0.0
        %713 = vmatprep.subr.mxu0 0.0
        %714 = vmatpush1.xpose.msra.mxu0 0.0
        %715 = vmatprep.subr.mxu0 0.0
        %716 = vmatpush1.xpose.msra.mxu0 0.0
        %717 = vmatprep.subr.mxu0 0.0
        %718 = vmatpush1.xpose.msra.mxu0 0.0
        %719 = vmatprep.subr.mxu0 0.0
        %720 = vmatpush1.xpose.msra.mxu0 0.0
        %721 = vmatprep.subr.mxu0 0.0
        %722 = vmatpush1.xpose.msra.mxu0 0.0
        %723 = vmatprep.subr.mxu0 0.0
        %724 = vmatpush1.xpose.msra.mxu0 0.0
        %725 = vmatprep.subr.mxu0 0.0
        %726 = vmatpush1.xpose.msra.mxu0 0.0
        %727 = vmatprep.subr.mxu0 0.0
        %728 = vmatpush1.xpose.msra.mxu0 0.0
        %729 = vmatprep.subr.mxu0 0.0
        %730 = vmatpush1.xpose.msra.mxu0 0.0
        %731 = vmatprep.subr.mxu0 0.0
        %732 = vmatpush1.xpose.msra.mxu0 0.0
        %733 = vmatprep.subr.mxu0 0.0
        %734 = vmatpush1.xpose.msra.mxu0 0.0
        %735 = vmatprep.mubr.f32.mxu0 0.0
        %736 = vmatmul.mubr.f32.gmra.mrb[0].mxu0 %v667
        %v737 = vpop.f32.mrb[0].mxu0
        %v738 = vadd.f32 0.0, %v737
        %v739 = vpop.f32.mrb[0].mxu0
        %740 = vdwg.mxu0
        %v741 = vsel %vm330, %v738, -1e+30
        %v742 = vsel %vm334, %v741, -inf
        %743 = vmax.xlane.f32.xlu0 %v742
        %v744 = vpop.xlane.xlu0 %743
        %v745 = vsub.f32 %v741, %v744
        %v746 = vmul.f32 %v745, 1.442695
        %v747 = vpow.pop %v746
        %v748 = vsel %vm334, %v747, 0.0
        %749 = vadd.xlane.f32.xlu0 %v748
        %v750 = vpop.xlane.xlu0 %749
        %v751 = vrcp.pop %v750
        %v752 = vmul.f32 %v747, %v751
        %753 = vrot.lane.b32.xlu0 %v323, 48
        %v754 = vpop.permute.xlu0 %753
        %v757 = vsel %vm334, %v752, 0
        %759 = vmatprep.subr.mxu0 0.0
        %760 = vmatpush1.msra.mxu0 %v754
        %761 = vmatprep.subr.mxu0 0.0
        %762 = vmatpush1.msra.mxu0 0.0
        %763 = vmatprep.subr.mxu0 0.0
        %764 = vmatpush1.msra.mxu0 0.0
        %765 = vmatprep.subr.mxu0 0.0
        %766 = vmatpush1.msra.mxu0 0.0
        %767 = vmatprep.subr.mxu0 0.0
        %768 = vmatpush1.msra.mxu0 0.0
        %769 = vmatprep.subr.mxu0 0.0
        %770 = vmatpush1.msra.mxu0 0.0
        %771 = vmatprep.subr.mxu0 0.0
        %772 = vmatpush1.msra.mxu0 0.0
        %773 = vmatprep.subr.mxu0 0.0
        %774 = vmatpush1.msra.mxu0 0.0
        %775 = vmatprep.subr.mxu0 0.0
        %776 = vmatpush1.msra.mxu0 0.0
        %777 = vmatprep.subr.mxu0 0.0
        %778 = vmatpush1.msra.mxu0 0.0
        %779 = vmatprep.subr.mxu0 0.0
        %780 = vmatpush1.msra.mxu0 0.0
        %781 = vmatprep.subr.mxu0 0.0
        %782 = vmatpush1.msra.mxu0 0.0
        %783 = vmatprep.subr.mxu0 0.0
        %784 = vmatpush1.msra.mxu0 0.0
        %785 = vmatprep.subr.mxu0 0.0
        %786 = vmatpush1.msra.mxu0 0.0
        %787 = vmatprep.subr.mxu0 0.0
        %788 = vmatpush1.msra.mxu0 0.0
        %789 = vmatprep.subr.mxu0 0.0
        %790 = vmatpush1.msra.mxu0 0.0
        %791 = vmatprep.subr.mxu0 0.0
        %792 = vmatpush1.msra.mxu0 0.0
        %793 = vmatprep.subr.mxu0 0.0
        %794 = vmatpush1.msra.mxu0 0.0
        %795 = vmatprep.subr.mxu0 0.0
        %796 = vmatpush1.msra.mxu0 0.0
        %797 = vmatprep.subr.mxu0 0.0
        %798 = vmatpush1.msra.mxu0 0.0
        %799 = vmatprep.subr.mxu0 0.0
        %800 = vmatpush1.msra.mxu0 0.0
        %801 = vmatprep.subr.mxu0 0.0
        %802 = vmatpush1.msra.mxu0 0.0
        %803 = vmatprep.subr.mxu0 0.0
        %804 = vmatpush1.msra.mxu0 0.0
        %805 = vmatprep.subr.mxu0 0.0
        %806 = vmatpush1.msra.mxu0 0.0
        %807 = vmatprep.subr.mxu0 0.0
        %808 = vmatpush1.msra.mxu0 0.0
        %809 = vmatprep.subr.mxu0 0.0
        %810 = vmatpush1.msra.mxu0 0.0
        %811 = vmatprep.subr.mxu0 0.0
        %812 = vmatpush1.msra.mxu0 0.0
        %813 = vmatprep.subr.mxu0 0.0
        %814 = vmatpush1.msra.mxu0 0.0
        %815 = vmatprep.subr.mxu0 0.0
        %816 = vmatpush1.msra.mxu0 0.0
        %817 = vmatprep.subr.mxu0 0.0
        %818 = vmatpush1.msra.mxu0 0.0
        %819 = vmatprep.subr.mxu0 0.0
        %820 = vmatpush1.msra.mxu0 0.0
        %821 = vmatprep.subr.mxu0 0.0
        %822 = vmatpush1.msra.mxu0 0.0
        %823 = vmatprep.mubr.f32.mxu0 0.0
        %824 = vmatmul.mubr.f32.gmra.mrb[0].mxu0 %v757
        %v825 = vpop.f32.mrb[0].mxu0
        %v826 = vadd.f32 0.0, %v825
        %v827 = vpop.f32.mrb[0].mxu0
        %828 = vdwg.mxu0
        %829 = vrot.lane.b32.xlu0 %v323, 104
        %v830 = vpop.permute.xlu0 %829
        %831 = vrot.lane.b32.xlu0 %v323, 72
        %v832 = vpop.permute.xlu0 %831
        %v833 = vsel %vm334, %v830, 0
        %v835 = vsel %vm334, %v832, 0
        %837 = vmatprep.subr.mxu0 0.0
        %838 = vmatpush1.xpose.msra.mxu0 %v835
        %839 = vmatprep.subr.mxu0 0.0
        %840 = vmatpush1.xpose.msra.mxu0 0.0
        %841 = vmatprep.subr.mxu0 0.0
        %842 = vmatpush1.xpose.msra.mxu0 0.0
        %843 = vmatprep.subr.mxu0 0.0
        %844 = vmatpush1.xpose.msra.mxu0 0.0
        %845 = vmatprep.subr.mxu0 0.0
        %846 = vmatpush1.xpose.msra.mxu0 0.0
        %847 = vmatprep.subr.mxu0 0.0
        %848 = vmatpush1.xpose.msra.mxu0 0.0
        %849 = vmatprep.subr.mxu0 0.0
        %850 = vmatpush1.xpose.msra.mxu0 0.0
        %851 = vmatprep.subr.mxu0 0.0
        %852 = vmatpush1.xpose.msra.mxu0 0.0
        %853 = vmatprep.subr.mxu0 0.0
        %854 = vmatpush1.xpose.msra.mxu0 0.0
        %855 = vmatprep.subr.mxu0 0.0
        %856 = vmatpush1.xpose.msra.mxu0 0.0
        %857 = vmatprep.subr.mxu0 0.0
        %858 = vmatpush1.xpose.msra.mxu0 0.0
        %859 = vmatprep.subr.mxu0 0.0
        %860 = vmatpush1.xpose.msra.mxu0 0.0
        %861 = vmatprep.subr.mxu0 0.0
        %862 = vmatpush1.xpose.msra.mxu0 0.0
        %863 = vmatprep.subr.mxu0 0.0
        %864 = vmatpush1.xpose.msra.mxu0 0.0
        %865 = vmatprep.subr.mxu0 0.0
        %866 = vmatpush1.xpose.msra.mxu0 0.0
        %867 = vmatprep.subr.mxu0 0.0
        %868 = vmatpush1.xpose.msra.mxu0 0.0
        %869 = vmatprep.subr.mxu0 0.0
        %870 = vmatpush1.xpose.msra.mxu0 0.0
        %871 = vmatprep.subr.mxu0 0.0
        %872 = vmatpush1.xpose.msra.mxu0 0.0
        %873 = vmatprep.subr.mxu0 0.0
        %874 = vmatpush1.xpose.msra.mxu0 0.0
        %875 = vmatprep.subr.mxu0 0.0
        %876 = vmatpush1.xpose.msra.mxu0 0.0
        %877 = vmatprep.subr.mxu0 0.0
        %878 = vmatpush1.xpose.msra.mxu0 0.0
        %879 = vmatprep.subr.mxu0 0.0
        %880 = vmatpush1.xpose.msra.mxu0 0.0
        %881 = vmatprep.subr.mxu0 0.0
        %882 = vmatpush1.xpose.msra.mxu0 0.0
        %883 = vmatprep.subr.mxu0 0.0
        %884 = vmatpush1.xpose.msra.mxu0 0.0
        %885 = vmatprep.subr.mxu0 0.0
        %886 = vmatpush1.xpose.msra.mxu0 0.0
        %887 = vmatprep.subr.mxu0 0.0
        %888 = vmatpush1.xpose.msra.mxu0 0.0
        %889 = vmatprep.subr.mxu0 0.0
        %890 = vmatpush1.xpose.msra.mxu0 0.0
        %891 = vmatprep.subr.mxu0 0.0
        %892 = vmatpush1.xpose.msra.mxu0 0.0
        %893 = vmatprep.subr.mxu0 0.0
        %894 = vmatpush1.xpose.msra.mxu0 0.0
        %895 = vmatprep.subr.mxu0 0.0
        %896 = vmatpush1.xpose.msra.mxu0 0.0
        %897 = vmatprep.subr.mxu0 0.0
        %898 = vmatpush1.xpose.msra.mxu0 0.0
        %899 = vmatprep.subr.mxu0 0.0
        %900 = vmatpush1.xpose.msra.mxu0 0.0
        %901 = vmatprep.mubr.f32.mxu0 0.0
        %902 = vmatmul.mubr.f32.gmra.mrb[0].mxu0 %v833
        %v903 = vpop.f32.mrb[0].mxu0
        %v904 = vadd.f32 0.0, %v903
        %v905 = vpop.f32.mrb[0].mxu0
        %906 = vdwg.mxu0
        %v907 = vsel %vm330, %v904, -1e+30
        %v908 = vsel %vm334, %v907, -inf
        %909 = vmax.xlane.f32.xlu0 %v908
        %v910 = vpop.xlane.xlu0 %909
        %v911 = vsub.f32 %v907, %v910
        %v912 = vmul.f32 %v911, 1.442695
        %v913 = vpow.pop %v912
        %v914 = vsel %vm334, %v913, 0.0
        %915 = vadd.xlane.f32.xlu0 %v914
        %v916 = vpop.xlane.xlu0 %915
        %v917 = vrcp.pop %v916
        %v918 = vmul.f32 %v913, %v917
        %919 = vrot.lane.b32.xlu0 %v323, 40
        %v920 = vpop.permute.xlu0 %919
        %v923 = vsel %vm334, %v918, 0
        %925 = vmatprep.subr.mxu0 0.0
        %926 = vmatpush1.msra.mxu0 %v920
        %927 = vmatprep.subr.mxu0 0.0
        %928 = vmatpush1.msra.mxu0 0.0
        %929 = vmatprep.subr.mxu0 0.0
        %930 = vmatpush1.msra.mxu0 0.0
        %931 = vmatprep.subr.mxu0 0.0
        %932 = vmatpush1.msra.mxu0 0.0
        %933 = vmatprep.subr.mxu0 0.0
        %934 = vmatpush1.msra.mxu0 0.0
        %935 = vmatprep.subr.mxu0 0.0
        %936 = vmatpush1.msra.mxu0 0.0
        %937 = vmatprep.subr.mxu0 0.0
        %938 = vmatpush1.msra.mxu0 0.0
        %939 = vmatprep.subr.mxu0 0.0
        %940 = vmatpush1.msra.mxu0 0.0
        %941 = vmatprep.subr.mxu0 0.0
        %942 = vmatpush1.msra.mxu0 0.0
        %943 = vmatprep.subr.mxu0 0.0
        %944 = vmatpush1.msra.mxu0 0.0
        %945 = vmatprep.subr.mxu0 0.0
        %946 = vmatpush1.msra.mxu0 0.0
        %947 = vmatprep.subr.mxu0 0.0
        %948 = vmatpush1.msra.mxu0 0.0
        %949 = vmatprep.subr.mxu0 0.0
        %950 = vmatpush1.msra.mxu0 0.0
        %951 = vmatprep.subr.mxu0 0.0
        %952 = vmatpush1.msra.mxu0 0.0
        %953 = vmatprep.subr.mxu0 0.0
        %954 = vmatpush1.msra.mxu0 0.0
        %955 = vmatprep.subr.mxu0 0.0
        %956 = vmatpush1.msra.mxu0 0.0
        %957 = vmatprep.subr.mxu0 0.0
        %958 = vmatpush1.msra.mxu0 0.0
        %959 = vmatprep.subr.mxu0 0.0
        %960 = vmatpush1.msra.mxu0 0.0
        %961 = vmatprep.subr.mxu0 0.0
        %962 = vmatpush1.msra.mxu0 0.0
        %963 = vmatprep.subr.mxu0 0.0
        %964 = vmatpush1.msra.mxu0 0.0
        %965 = vmatprep.subr.mxu0 0.0
        %966 = vmatpush1.msra.mxu0 0.0
        %967 = vmatprep.subr.mxu0 0.0
        %968 = vmatpush1.msra.mxu0 0.0
        %969 = vmatprep.subr.mxu0 0.0
        %970 = vmatpush1.msra.mxu0 0.0
        %971 = vmatprep.subr.mxu0 0.0
        %972 = vmatpush1.msra.mxu0 0.0
        %973 = vmatprep.subr.mxu0 0.0
        %974 = vmatpush1.msra.mxu0 0.0
        %975 = vmatprep.subr.mxu0 0.0
        %976 = vmatpush1.msra.mxu0 0.0
        %977 = vmatprep.subr.mxu0 0.0
        %978 = vmatpush1.msra.mxu0 0.0
        %979 = vmatprep.subr.mxu0 0.0
        %980 = vmatpush1.msra.mxu0 0.0
        %981 = vmatprep.subr.mxu0 0.0
        %982 = vmatpush1.msra.mxu0 0.0
        %983 = vmatprep.subr.mxu0 0.0
        %984 = vmatpush1.msra.mxu0 0.0
        %985 = vmatprep.subr.mxu0 0.0
        %986 = vmatpush1.msra.mxu0 0.0
        %987 = vmatprep.subr.mxu0 0.0
        %988 = vmatpush1.msra.mxu0 0.0
        %989 = vmatprep.mubr.f32.mxu0 0.0
        %990 = vmatmul.mubr.f32.gmra.mrb[0].mxu0 %v923
        %v991 = vpop.f32.mrb[0].mxu0
        %v992 = vadd.f32 0.0, %v991
        %v993 = vpop.f32.mrb[0].mxu0
        %994 = vdwg.mxu0
        %996 = vrot.lane.b32.xlu0 %v660, 8
        %v997 = vpop.permute.xlu0 %996
        %1000 = vrot.lane.b32.xlu0 %v826, 16
        %v1001 = vpop.permute.xlu0 %1000
        %1004 = vrot.lane.b32.xlu0 %v992, 24
        %v1005 = vpop.permute.xlu0 %1004
        %v1007 = vsel %vm334, %v494, %v997
        %vm1008 = vcmask 130048
        %v1009 = vsel %vm1008, %v1007, %v1001
        %vm1010 = vcmask 195584
        %v1011 = vsel %vm1010, %v1009, %v1005
        %v1013 = vlaneseq
        %v1014 = vshrl.u32 %v1013, 7
        %v1015 = vsub.s32 0, %v1014
        %v1016 = vrot.slane %v251, %v1015
        %v1019 = vsel %vm252, %v1011, 0
        %1021 = vmatprep.subr.mxu0 0.0
        %1022 = vmatpush1.msra.mxu0 %v247
        %1023 = vmatprep.subr.mxu0 0.0
        %1024 = vmatpush1.msra.mxu0 %v248
        %1025 = vmatprep.subr.mxu0 0.0
        %1026 = vmatpush1.msra.mxu0 %v249
        %1027 = vmatprep.subr.mxu0 0.0
        %1028 = vmatpush1.msra.mxu0 %v250
        %1029 = vmatprep.subr.mxu0 0.0
        %1030 = vmatpush1.msra.mxu0 0.0
        %1031 = vmatprep.subr.mxu0 0.0
        %1032 = vmatpush1.msra.mxu0 0.0
        %1033 = vmatprep.subr.mxu0 0.0
        %1034 = vmatpush1.msra.mxu0 0.0
        %1035 = vmatprep.subr.mxu0 0.0
        %1036 = vmatpush1.msra.mxu0 0.0
        %1037 = vmatprep.subr.mxu0 0.0
        %1038 = vmatpush1.msra.mxu0 0.0
        %1039 = vmatprep.subr.mxu0 0.0
        %1040 = vmatpush1.msra.mxu0 0.0
        %1041 = vmatprep.subr.mxu0 0.0
        %1042 = vmatpush1.msra.mxu0 0.0
        %1043 = vmatprep.subr.mxu0 0.0
        %1044 = vmatpush1.msra.mxu0 0.0
        %1045 = vmatprep.subr.mxu0 0.0
        %1046 = vmatpush1.msra.mxu0 0.0
        %1047 = vmatprep.subr.mxu0 0.0
        %1048 = vmatpush1.msra.mxu0 0.0
        %1049 = vmatprep.subr.mxu0 0.0
        %1050 = vmatpush1.msra.mxu0 0.0
        %1051 = vmatprep.subr.mxu0 0.0
        %1052 = vmatpush1.msra.mxu0 0.0
        %1053 = vmatprep.subr.mxu0 0.0
        %1054 = vmatpush1.msra.mxu0 0.0
        %1055 = vmatprep.subr.mxu0 0.0
        %1056 = vmatpush1.msra.mxu0 0.0
        %1057 = vmatprep.subr.mxu0 0.0
        %1058 = vmatpush1.msra.mxu0 0.0
        %1059 = vmatprep.subr.mxu0 0.0
        %1060 = vmatpush1.msra.mxu0 0.0
        %1061 = vmatprep.subr.mxu0 0.0
        %1062 = vmatpush1.msra.mxu0 0.0
        %1063 = vmatprep.subr.mxu0 0.0
        %1064 = vmatpush1.msra.mxu0 0.0
        %1065 = vmatprep.subr.mxu0 0.0
        %1066 = vmatpush1.msra.mxu0 0.0
        %1067 = vmatprep.subr.mxu0 0.0
        %1068 = vmatpush1.msra.mxu0 0.0
        %1069 = vmatprep.subr.mxu0 0.0
        %1070 = vmatpush1.msra.mxu0 0.0
        %1071 = vmatprep.subr.mxu0 0.0
        %1072 = vmatpush1.msra.mxu0 0.0
        %1073 = vmatprep.subr.mxu0 0.0
        %1074 = vmatpush1.msra.mxu0 0.0
        %1075 = vmatprep.subr.mxu0 0.0
        %1076 = vmatpush1.msra.mxu0 0.0
        %1077 = vmatprep.subr.mxu0 0.0
        %1078 = vmatpush1.msra.mxu0 0.0
        %1079 = vmatprep.subr.mxu0 0.0
        %1080 = vmatpush1.msra.mxu0 0.0
        %1081 = vmatprep.subr.mxu0 0.0
        %1082 = vmatpush1.msra.mxu0 0.0
        %1083 = vmatprep.subr.mxu0 0.0
        %1084 = vmatpush1.msra.mxu0 0.0
        %1085 = vmatprep.mubr.f32.mxu0 0.0
        %1086 = vmatmul.mubr.f32.gmra.mrb[0].mxu0 %v1019
        %v1087 = vpop.f32.mrb[0].mxu0
        %v1088 = vadd.f32 %v1016, %v1087
        %v1089 = vpop.f32.mrb[0].mxu0
        %1090 = vdwg.mxu0
        %1091 = vst.msk [vmem:[%s241] sm:$0xff] %vm252, %v1088
        %s1092 = sand.u32 %s119, 1
        %s1093 = scalar_lea.sflag [#allocation4], %s1092
        %s1094 = sand.u32 %s119, 1
        %s1095 = smul.addr %s1094, 8
        %s1096 = scalar_lea.vmem [#allocation8], %s1095
        // Predicated region
        $region49: #{tpu_custom_call.1} parent=35 // pred_check
          %p1097 = pneg %p129
        $region50: #{tpu_custom_call.1} parent=35 // pred_check_branch
          %1099 = sbr.rel (%p1097) target = $region52
        $region51: #{tpu_custom_call.1} parent=35 // pred_region
          %s1101 = ssub.s32 128, 128
          %1102 = vsyncadd %s1093, %s1101
          %s1103 = smul.addr %s22, 128
          %s1104 = scalar_lea.hbm %s4, %s1103
          %s1106 = sshll.u32 %s1096, 4
          %s1107 = int_to_ptr.vmem [resolvable:$true] %s1106
          %1109 = dma.vmem_to_hbm [thread:$0]  %s1107, 128, %s1104, %s1093
        $region52: #{tpu_custom_call.1} parent=35 // pred_fallthru
          _
      $region36: #{tpu_custom_call.1} parent=5 // pred_fallthru
        _
      %p1110 = scmp.le.s32.totalorder 2, %s17
      // Predicated region
      $region53: #{tpu_custom_call.1} parent=5 // pred_check
        %p1111 = pneg %p1110
      $region54: #{tpu_custom_call.1} parent=5 // pred_check_branch
        %1113 = sbr.rel (%p1111) target = $region56
      $region55: #{tpu_custom_call.1} parent=5 // pred_region
        %s1114 = ssub.s32 %s17, 2
        // Predicated region
        $region57: #{tpu_custom_call.1} parent=55 // pred_check
          %p1115 = pneg %p135
        $region58: #{tpu_custom_call.1} parent=55 // pred_check_branch
          %1117 = sbr.rel (%p1115) target = $region60
        $region59: #{tpu_custom_call.1} parent=55 // pred_region
          %s1118 = sand.u32 %s120, 1
          %s1119 = scalar_lea.sflag [#allocation4], %s1118
          %s1120 = sand.u32 %s120, 1
          %s1121 = smul.addr %s1120, 8
          %s1122 = scalar_lea.vmem [#allocation8], %s1121
          %1123 = dma.done %s1119, 128
        $region60: #{tpu_custom_call.1} parent=55 // pred_fallthru
          _
      $region56: #{tpu_custom_call.1} parent=5 // pred_fallthru
        _
    $region6: #{tpu_custom_call.1} parent=1 // loop_footer
      %s21 = sadd.s32 1, %s17
    $region7: #{tpu_custom_call.1} parent=1 // loop_footer_branch
      %16 = sbr.rel target = $region3
    $region8: #{tpu_custom_call.1} parent=1 // loop_exit
      _
    %1124 = vsyncpa [#allocation3], 1
    %s1125 = scalar_lea.sflag [#allocation3], 1
    %1126 = vsyncpa %s1125, 1
    %1127 = vsyncpa [#allocation6], 1
    %1128 = vsyncpa [#allocation4], 1
    %s1129 = scalar_lea.sflag [#allocation4], 1
    %1130 = vsyncpa %s1129, 1

</llo_original>
